<compile_context>
chip_gen: v7x
topology: tpu7x:2x2x1
jax: 0.10.0
libtpu: 0.0.40
codegen_flags: <defaults>
</compile_context>

<pallas_src>
import jax
import jax.numpy as jnp
from jax import lax
from jax.experimental import pallas as pl
from jax.experimental.pallas import tpu as pltpu

EPS = 1e-5


# ---------------------------------------------------------------------------
# Pallas kernel: MXU GEMM + folded-BN bias + ReLU
# ---------------------------------------------------------------------------
def _gemm_bias_relu_kernel(a_ref, wt_ref, b_ref, o_ref):
    # a_ref : (K, B*H*W)   im2col operand block (K on sublanes, stream on lanes)
    # wt_ref: (Cout, K)    BN-folded weights (K on lanes)
    # b_ref : (Cout, 1)    BN-folded bias
    # o_ref : (Cout, B*H*W) channel-major, lane-dense output block
    y = jnp.dot(wt_ref[...], a_ref[...], preferred_element_type=jnp.float32)
    o_ref[...] = jnp.maximum(y + b_ref[...], 0.0)


# ---------------------------------------------------------------------------
# Host wrapper
# ---------------------------------------------------------------------------
@jax.jit
def ct_conv3x3_forward(x_nchw, wt_packed, bias):
    """x_nchw: (N, Cin, H, W) float32.  Returns (N, Cout, H, W) float32."""
    N, Cin, H, W = x_nchw.shape
    Cout, K = wt_packed.shape            # K = 9 * Cin
    HW = H * W

    # Images per grid step: keep >= 2 grid blocks whenever N >= 2 so v7x's two
    # TensorCores are both fed; cap at 8 images/step (VMEM stays tiny).
    block_n = min(8, max(1, (N + 1) // 2))
    nb = -(-N // block_n)                # ceil(N / block_n)
    Npad = nb * block_n

    # Host-side im2col, fused by XLA with the zero-padding in one small pass:
    #   a[k, n*HW + m] = x_pad[n, ci, h+dh, w+dw]
    # with k = (dh*3 + dw)*Cin + ci  (matches fold_bn_pack column order)
    # and  m = h*W + w.
    xp = jnp.pad(x_nchw, ((0, Npad - N), (0, 0), (1, 1), (1, 1)))
    taps = [xp[:, :, dh:dh + H, dw:dw + W]
            for dh in range(3) for dw in range(3)]        # 9 x (Npad,Cin,H,W)
    a = jnp.stack(taps, axis=1)                           # (Npad, 9, Cin, H, W)
    a = a.reshape(Npad, K, HW)                            # rows ordered (tap, ci)
    a = jnp.transpose(a, (1, 0, 2)).reshape(K, Npad * HW) # (K, Npad*HW)

    b2 = bias.reshape(Cout, 1)

    # VMEM budget: double-buffered input/output blocks + (single-use) weights.
    itemsize = 4
    blk_in = K * block_n * HW * itemsize
    blk_out = Cout * block_n * HW * itemsize
    w_bytes = Cout * K * itemsize + Cout * 128 * itemsize
    vmem_limit = int(min(max(2 * (2 * (blk_in + blk_out) + 2 * w_bytes),
                             16 * 1024 * 1024),
                         64 * 1024 * 1024))

    out = pl.pallas_call(
        _gemm_bias_relu_kernel,
        out_shape=jax.ShapeDtypeStruct((Cout, Npad * HW), jnp.float32),
        grid=(nb,),
        in_specs=[
            pl.BlockSpec((K, block_n * HW), lambda g: (0, g)),
            pl.BlockSpec((Cout, K), lambda g: (0, 0)),
            pl.BlockSpec((Cout, 1), lambda g: (0, 0)),
        ],
        out_specs=pl.BlockSpec((Cout, block_n * HW), lambda g: (0, g)),
        compiler_params=pltpu.CompilerParams(
            dimension_semantics=("parallel",),
            vmem_limit_bytes=vmem_limit),
    )(a, wt_packed, b2)

    # (Cout, Npad*HW) -> (Npad, Cout, HW) -> drop batch padding -> NCHW.
    out = out.reshape(Cout, Npad, HW).transpose(1, 0, 2)[:N]
    return out.reshape(N, Cout, H, W)


# ---------------------------------------------------------------------------
# Parameter folding (eval-mode BatchNorm into conv weights / bias) + packing
# ---------------------------------------------------------------------------
def fold_bn_pack(conv_w_oihw, gamma, beta, mean, var, eps=EPS):
    """conv_w_oihw: (Cout, Cin, 3, 3).  Returns ((Cout, 9*Cin), (Cout,))."""
    scale = gamma / jnp.sqrt(var + eps)                          # (Cout,)
    w = conv_w_oihw * scale[:, None, None, None]                 # fold BN scale
    # (Cout, Cin, 3, 3) -> (Cout, 3, 3, Cin) -> (Cout, 9*Cin); column order
    # is (dh, dw, ci), matching the host-side im2col row order.
    wt = jnp.transpose(w, (0, 2, 3, 1)).reshape(w.shape[0], -1)
    b = beta - mean * scale                                      # conv has no bias
    return wt, b


# ---------------------------------------------------------------------------
# Pure-JAX reference (explicit conv + eval-mode BN + ReLU)
# ---------------------------------------------------------------------------
def reference_forward(x_nchw, conv_w_oihw, gamma, beta, mean, var, eps=EPS):
    y = lax.conv_general_dilated(
        x_nchw, conv_w_oihw, window_strides=(1, 1), padding="SAME",
        dimension_numbers=("NCHW", "OIHW", "NCHW"),
        precision=lax.Precision.HIGHEST)
    y = gamma[None, :, None, None] * (y - mean[None, :, None, None]) \
        / jnp.sqrt(var + eps)[None, :, None, None] + beta[None, :, None, None]
    return jnp.maximum(y, 0.0)


# ---------------------------------------------------------------------------
if __name__ == "__main__":
    key = jax.random.PRNGKey(0)
    kx, kw, kg, kb, km, kv = jax.random.split(key, 6)

    # CT_conv3x3(input_dim=32, output_dim=64) on a PyTorch-style NCHW input.
    N, Cin, Cout, H, W = 2, 32, 64, 16, 16
    x = jax.random.normal(kx, (N, Cin, H, W), jnp.float32)

    conv_w = jax.random.normal(kw, (Cout, Cin, 3, 3), jnp.float32) * 0.05
    gamma = 1.0 + 0.1 * jax.random.normal(kg, (Cout,), jnp.float32)
    beta = 0.1 * jax.random.normal(kb, (Cout,), jnp.float32)
    mean = 0.1 * jax.random.normal(km, (Cout,), jnp.float32)
    var = jax.random.uniform(kv, (Cout,), jnp.float32, 0.5, 1.5)

    # TODO(synk): training-mode BatchNorm (batch statistics + running-stat
    # update) is not implemented; eval-mode running stats are folded instead.
    wt_packed, bias = fold_bn_pack(conv_w, gamma, beta, mean, var)

    out = jax.block_until_ready(ct_conv3x3_forward(x, wt_packed, bias))
    ref = jax.block_until_ready(
        reference_forward(x, conv_w, gamma, beta, mean, var))

    assert out.shape == (N, Cout, H, W) and out.dtype == jnp.float32
    err = float(jnp.max(jnp.abs(out - ref)))
    assert err < 5e-4, f"mismatch vs reference: max abs err = {err}"
    print("KERNEL_OK")
</pallas_src>

<mosaic_0001>
module attributes {stable_mosaic.version = 11 : i64} {
  func.func @_gemm_bias_relu_kernel(%arg0: i32, %arg1: memref<288x256xf32, #tpu.memory_space<vmem>>, %arg2: memref<64x288xf32, #tpu.memory_space<vmem>>, %arg3: memref<64x1xf32, #tpu.memory_space<vmem>>, %arg4: memref<64x256xf32, #tpu.memory_space<vmem>>) attributes {dimension_semantics = [#tpu.dimension_semantics<parallel>], iteration_bounds = array<i64: 2>, scalar_prefetch = 0 : i64, scratch_operands = 0 : i64, tpu.core_type = #tpu.core_type<tc>, window_params = [{transform_indices = @transform_0, window_bounds = array<i64: 288, 256>}, {pipeline_mode = #tpu.pipeline_mode<synchronous>, transform_indices = @transform_1, window_bounds = array<i64: 64, 288>}, {pipeline_mode = #tpu.pipeline_mode<synchronous>, transform_indices = @transform_2, window_bounds = array<i64: 64, 1>}, {transform_indices = @transform_3, window_bounds = array<i64: 64, 256>}]} {
    %c0 = arith.constant 0 : index
    %c0_0 = arith.constant 0 : index
    %0 = vector.load %arg2[%c0, %c0_0] : memref<64x288xf32, #tpu.memory_space<vmem>>, vector<64x288xf32>
    %c0_1 = arith.constant 0 : index
    %c0_2 = arith.constant 0 : index
    %1 = vector.load %arg1[%c0_1, %c0_2] : memref<288x256xf32, #tpu.memory_space<vmem>>, vector<288x256xf32>
    %cst = arith.constant dense<0.000000e+00> : vector<64x256xf32>
    %2 = tpu.matmul %0, %1, %cst {dimension_numbers = #tpu.dot_dimension_numbers<[1], [0], [0], [1], [0, 0, 1, 1], [], []>} : vector<64x288xf32>, vector<288x256xf32>, vector<64x256xf32> -> vector<64x256xf32>
    %c0_3 = arith.constant 0 : index
    %c0_4 = arith.constant 0 : index
    %3 = vector.load %arg3[%c0_3, %c0_4] : memref<64x1xf32, #tpu.memory_space<vmem>>, vector<64x1xf32>
    %4 = vector.broadcast %3 : vector<64x1xf32> to vector<64x256xf32>
    %5 = arith.addf %2, %4 : vector<64x256xf32>
    %cst_5 = arith.constant 0.000000e+00 : f32
    %6 = vector.broadcast %cst_5 : f32 to vector<64x256xf32>
    %7 = arith.maximumf %5, %6 : vector<64x256xf32>
    %c0_6 = arith.constant 0 : index
    %c0_7 = arith.constant 0 : index
    %8 = vector.load %arg4[%c0_6, %c0_7] : memref<64x256xf32, #tpu.memory_space<vmem>>, vector<64x256xf32>
    tpu.vector_store %arg4[%c0_6, %c0_7], %7 {strides = array<i32>} : memref<64x256xf32, #tpu.memory_space<vmem>>, vector<64x256xf32>,
    return
  }
  func.func @transform_0(%arg0: i32) -> (i32, i32) {
    %c0_i32 = arith.constant 0 : i32
    %c0_i32_0 = arith.constant 0 : i32
    return %c0_i32, %arg0 : i32, i32
  }
  func.func @transform_1(%arg0: i32) -> (i32, i32) {
    %c0_i32 = arith.constant 0 : i32
    %c0_i32_0 = arith.constant 0 : i32
    %c0_i32_1 = arith.constant 0 : i32
    return %c0_i32, %c0_i32_0 : i32, i32
  }
  func.func @transform_2(%arg0: i32) -> (i32, i32) {
    %c0_i32 = arith.constant 0 : i32
    %c0_i32_0 = arith.constant 0 : i32
    %c0_i32_1 = arith.constant 0 : i32
    return %c0_i32, %c0_i32_0 : i32, i32
  }
  func.func @transform_3(%arg0: i32) -> (i32, i32) {
    %c0_i32 = arith.constant 0 : i32
    %c0_i32_0 = arith.constant 0 : i32
    return %c0_i32, %arg0 : i32, i32
  }
}

</mosaic_0001>

<llo_original>
// kernel: ct_conv3x3_forward.1
$region0: #{ct_conv3x3_forward.1}
  #allocation0 [shape = 'u32[]', space=smem, size = 0x4, offset = 0x4, fixed_abs, tag = 'smem constant byte address 0x4 - core index']
  #allocation1 [shape = 'u32[144,128]{1,0:T(1,128)}', space=vmem, size = 0x12000, scoped, tag = 'internal scratch']
  %s0 = inlined_call_operand.vmem [shape: f32[288,512], index: 0, kind: input, shape index: {}]
  %s1 = inlined_call_operand.vmem [shape: f32[64,288], index: 1, kind: input, shape index: {}]
  %s2 = inlined_call_operand.vmem [shape: f32[64,1], index: 2, kind: input, shape index: {}]
  %s3 = inlined_call_operand.vmem [shape: f32[64,512], index: 3, kind: output, shape index: {}]
  %s4 = sld [smem:[#allocation0]]
  $region87: #{ct_conv3x3_forward.1} parent=0
    _
  %s6 = ssub.s32 1, %s4
  %s7 = scalar_select 0, %s6, %s4
  $region1: #{ct_conv3x3_forward.1} parent=0
    #allocation2 [shape = 'u8[589824]{0}', space=vmem, size = 0x90000, scoped, tag = 'input window, operand 0']
    #allocation3 [shape = 'u8[131072]{0}', space=vmem, size = 0x20000, scoped, tag = 'output window, operand 0']
    loop: start=0, step=1, limit=4
    $region2: #{ct_conv3x3_forward.1} parent=1 // loop_pre_header
      _
    $region3: #{ct_conv3x3_forward.1} parent=1 // loop_header
      %s9 = sphi 0, %s13
      %p10 = scmp.ge.s32.totalorder %s9, 4
      %s19 = sphi 0, %s21
      %s22 = sphi 0, %s19
      %s23 = sphi 0, %s22
      %s39 = sphi 0, %s23
      %s43 = sphi 0, %s43
      %s45 = sphi 0, %s43
      %s46 = sphi 0, %s45
      %s60 = sphi 0, %s46
      %s64 = sphi 0, %s64
      %s66 = sphi 0, %s64
      %s67 = sphi 0, %s66
      %s81 = sphi 0, %s67
      %s87 = sphi 0, %s89
      %s90 = sphi 0, %s87
      %s91 = sphi 0, %s90
      %s107 = sphi 0, %s91
    $region4: #{ct_conv3x3_forward.1} parent=1 // loop_header_branch
      %12 = sbr.rel (%p10) target = $region8
    $region5: #{ct_conv3x3_forward.1} parent=1 // loop_body
      %s14 = ssub.s32 %s9, 1
      %s15 = ssub.s32 %s9, 2
      %s16 = sadd.s32 %s9, 1
      %s17 = ssub.s32 %s9, %s16
      %p18 = scmp.eq.s32.totalorder %s17, 0
      %s20 = sadd.s32 %s19, 1
      %s21 = scalar_select %p18, %s19, %s20
      %p24 = pneg %p18
      %p25 = scmp.eq.s32.totalorder %s9, 1
      %p26 = por %p24, %p25
      %p27 = scmp.ne.s32.totalorder %s19, %s22
      %p28 = scmp.eq.s32.totalorder %s9, 0
      %p29 = por %p27, %p28
      %p30 = scmp.ne.s32.totalorder %s19, %s22
      %p31 = scmp.eq.s32.totalorder %s14, 1
      %p32 = por %p30, %p31
      %p33 = scmp.ne.s32.totalorder %s22, %s23
      %p34 = scmp.eq.s32.totalorder %s14, 0
      %p35 = por %p33, %p34
      %p36 = scmp.ne.s32.totalorder %s22, %s23
      %p37 = scmp.eq.s32.totalorder %s15, 1
      %p38 = por %p36, %p37
      %p40 = scmp.ne.s32.totalorder %s23, %s39
      %p41 = scmp.eq.s32.totalorder %s15, 0
      %p42 = por %p40, %p41
      %s44 = sadd.s32 %s43, 1
      %p47 = scmp.eq.s32.totalorder %s9, 1
      %p48 = scmp.ne.s32.totalorder %s43, %s45
      %p49 = scmp.eq.s32.totalorder %s9, 0
      %p50 = por %p48, %p49
      %p51 = scmp.ne.s32.totalorder %s43, %s45
      %p52 = scmp.eq.s32.totalorder %s14, 1
      %p53 = por %p51, %p52
      %p54 = scmp.ne.s32.totalorder %s45, %s46
      %p55 = scmp.eq.s32.totalorder %s14, 0
      %p56 = por %p54, %p55
      %p57 = scmp.ne.s32.totalorder %s45, %s46
      %p58 = scmp.eq.s32.totalorder %s15, 1
      %p59 = por %p57, %p58
      %p61 = scmp.ne.s32.totalorder %s46, %s60
      %p62 = scmp.eq.s32.totalorder %s15, 0
      %p63 = por %p61, %p62
      %s65 = sadd.s32 %s64, 1
      %p68 = scmp.eq.s32.totalorder %s9, 1
      %p69 = scmp.ne.s32.totalorder %s64, %s66
      %p70 = scmp.eq.s32.totalorder %s9, 0
      %p71 = por %p69, %p70
      %p72 = scmp.ne.s32.totalorder %s64, %s66
      %p73 = scmp.eq.s32.totalorder %s14, 1
      %p74 = por %p72, %p73
      %p75 = scmp.ne.s32.totalorder %s66, %s67
      %p76 = scmp.eq.s32.totalorder %s14, 0
      %p77 = por %p75, %p76
      %p78 = scmp.ne.s32.totalorder %s66, %s67
      %p79 = scmp.eq.s32.totalorder %s15, 1
      %p80 = por %p78, %p79
      %p82 = scmp.ne.s32.totalorder %s67, %s81
      %p83 = scmp.eq.s32.totalorder %s15, 0
      %p84 = por %p82, %p83
      %s85 = ssub.s32 %s9, %s16
      %p86 = scmp.eq.s32.totalorder %s85, 0
      %s88 = sadd.s32 %s87, 1
      %s89 = scalar_select %p86, %s87, %s88
      %p92 = pneg %p86
      %p93 = scmp.eq.s32.totalorder %s9, 1
      %p94 = por %p92, %p93
      %p95 = scmp.ne.s32.totalorder %s87, %s90
      %p96 = scmp.eq.s32.totalorder %s9, 0
      %p97 = por %p95, %p96
      %p98 = scmp.ne.s32.totalorder %s87, %s90
      %p99 = scmp.eq.s32.totalorder %s14, 1
      %p100 = por %p98, %p99
      %p101 = scmp.ne.s32.totalorder %s90, %s91
      %p102 = scmp.eq.s32.totalorder %s14, 0
      %p103 = por %p101, %p102
      %p104 = scmp.ne.s32.totalorder %s90, %s91
      %p105 = scmp.eq.s32.totalorder %s15, 1
      %p106 = por %p104, %p105
      %p108 = scmp.ne.s32.totalorder %s91, %s107
      %p109 = scmp.eq.s32.totalorder %s15, 0
      %p110 = por %p108, %p109
      %p111 = scmp.le.s32.totalorder 1, %s9
      %p112 = scmp.lt.s32.totalorder %s9, 3
      %p113 = pnand %p111, %p112
      %p114 = pneg %p113
      // Predicated region
      $region9: #{ct_conv3x3_forward.1} parent=5 // pred_check
        _
      $region10: #{ct_conv3x3_forward.1} parent=5 // pred_check_branch
        %116 = sbr.rel (%p113) target = $region12
      $region11: #{ct_conv3x3_forward.1} parent=5 // pred_region
        %s117 = ssub.s32 %s9, 1
        // Predicated region
        $region13: #{ct_conv3x3_forward.1} parent=11 // pred_check
          %p118 = pneg %p56
        $region14: #{ct_conv3x3_forward.1} parent=11 // pred_check_branch
          %120 = sbr.rel (%p118) target = $region16
        $region15: #{ct_conv3x3_forward.1} parent=11 // pred_region
          _
        $region16: #{ct_conv3x3_forward.1} parent=11 // pred_fallthru
          _
        // Predicated region
        $region17: #{ct_conv3x3_forward.1} parent=11 // pred_check
          %p121 = pneg %p77
        $region18: #{ct_conv3x3_forward.1} parent=11 // pred_check_branch
          %123 = sbr.rel (%p121) target = $region20
        $region19: #{ct_conv3x3_forward.1} parent=11 // pred_region
          _
        $region20: #{ct_conv3x3_forward.1} parent=11 // pred_fallthru
          _
      $region12: #{ct_conv3x3_forward.1} parent=5 // pred_fallthru
        _
      %p124 = scmp.lt.s32.totalorder %s9, 2
      // Predicated region
      $region21: #{ct_conv3x3_forward.1} parent=5 // pred_check
        %p125 = pneg %p124
      $region22: #{ct_conv3x3_forward.1} parent=5 // pred_check_branch
        %127 = sbr.rel (%p125) target = $region24
      $region23: #{ct_conv3x3_forward.1} parent=5 // pred_region
        // Predicated region
        $region25: #{ct_conv3x3_forward.1} parent=23 // pred_check
          %p128 = pneg %p29
        $region26: #{ct_conv3x3_forward.1} parent=23 // pred_check_branch
          %130 = sbr.rel (%p128) target = $region28
        $region27: #{ct_conv3x3_forward.1} parent=23 // pred_region
          %s131 = sand.u32 %s19, 1
          %s132 = sand.u32 %s19, 1
          %s133 = smul.addr %s132, 576
          %s134 = scalar_lea.vmem [#allocation2], %s133
          %s135 = smul.u32 2, %s9
          %s136 = smul.addr %s135, 8
          %s137 = scalar_lea.vmem %s0, %s136
          // Predicated region
          $region29: #{ct_conv3x3_forward.1} parent=27 // pred_check
            _
          $region30: #{ct_conv3x3_forward.1} parent=27 // pred_check_branch
            %139 = sbr.rel (0) target = $region32
          $region31: #{ct_conv3x3_forward.1} parent=27 // pred_region
            // Predicated region
            $region33: #{ct_conv3x3_forward.1} parent=31 // pred_check
              _
            $region34: #{ct_conv3x3_forward.1} parent=31 // pred_check_branch
              %141 = sbr.rel (0) target = $region36
            $region35: #{ct_conv3x3_forward.1} parent=31 // pred_region
              loop: start=0, step=1, limit=1
              $region37: #{ct_conv3x3_forward.1} parent=35 // loop_pre_header
                _
              $region38: #{ct_conv3x3_forward.1} parent=35 // loop_header
                %s143 = sphi 0, %s147
                %p144 = scmp.ge.s32.totalorder %s143, 1
                %s148 = sphi %s137, %s137
                %s149 = sphi %s134, %s134
              $region39: #{ct_conv3x3_forward.1} parent=35 // loop_header_branch
                %146 = sbr.rel (%p144) target = $region43
              $region40: #{ct_conv3x3_forward.1} parent=35 // loop_body
                %v150 = vld [vmem:[%s148] sm:$0xff]
                %151 = vst [vmem:[%s149] sm:$0xff] %v150
                %v152 = vld [vmem:[%s148 + $0x8] sm:$0xff]
                %153 = vst [vmem:[%s149 + $0x8] sm:$0xff] %v152
                %v154 = vld [vmem:[%s148 + $0x20] sm:$0xff]
                %155 = vst [vmem:[%s149 + $0x10] sm:$0xff] %v154
                %v156 = vld [vmem:[%s148 + $0x28] sm:$0xff]
                %157 = vst [vmem:[%s149 + $0x18] sm:$0xff] %v156
                %v158 = vld [vmem:[%s148 + $0x40] sm:$0xff]
                %159 = vst [vmem:[%s149 + $0x20] sm:$0xff] %v158
                %v160 = vld [vmem:[%s148 + $0x48] sm:$0xff]
                %161 = vst [vmem:[%s149 + $0x28] sm:$0xff] %v160
                %v162 = vld [vmem:[%s148 + $0x60] sm:$0xff]
                %163 = vst [vmem:[%s149 + $0x30] sm:$0xff] %v162
                %v164 = vld [vmem:[%s148 + $0x68] sm:$0xff]
                %165 = vst [vmem:[%s149 + $0x38] sm:$0xff] %v164
                %v166 = vld [vmem:[%s148 + $0x80] sm:$0xff]
                %167 = vst [vmem:[%s149 + $0x40] sm:$0xff] %v166
                %v168 = vld [vmem:[%s148 + $0x88] sm:$0xff]
                %169 = vst [vmem:[%s149 + $0x48] sm:$0xff] %v168
                %v170 = vld [vmem:[%s148 + $0xa0] sm:$0xff]
                %171 = vst [vmem:[%s149 + $0x50] sm:$0xff] %v170
                %v172 = vld [vmem:[%s148 + $0xa8] sm:$0xff]
                %173 = vst [vmem:[%s149 + $0x58] sm:$0xff] %v172
                %v174 = vld [vmem:[%s148 + $0xc0] sm:$0xff]
                %175 = vst [vmem:[%s149 + $0x60] sm:$0xff] %v174
                %v176 = vld [vmem:[%s148 + $0xc8] sm:$0xff]
                %177 = vst [vmem:[%s149 + $0x68] sm:$0xff] %v176
                %v178 = vld [vmem:[%s148 + $0xe0] sm:$0xff]
                %179 = vst [vmem:[%s149 + $0x70] sm:$0xff] %v178
                %v180 = vld [vmem:[%s148 + $0xe8] sm:$0xff]
                %181 = vst [vmem:[%s149 + $0x78] sm:$0xff] %v180
                %v182 = vld [vmem:[%s148 + $0x100] sm:$0xff]
                %183 = vst [vmem:[%s149 + $0x80] sm:$0xff] %v182
                %v184 = vld [vmem:[%s148 + $0x108] sm:$0xff]
                %185 = vst [vmem:[%s149 + $0x88] sm:$0xff] %v184
                %v186 = vld [vmem:[%s148 + $0x120] sm:$0xff]
                %187 = vst [vmem:[%s149 + $0x90] sm:$0xff] %v186
                %v188 = vld [vmem:[%s148 + $0x128] sm:$0xff]
                %189 = vst [vmem:[%s149 + $0x98] sm:$0xff] %v188
                %v190 = vld [vmem:[%s148 + $0x140] sm:$0xff]
                %191 = vst [vmem:[%s149 + $0xa0] sm:$0xff] %v190
                %v192 = vld [vmem:[%s148 + $0x148] sm:$0xff]
                %193 = vst [vmem:[%s149 + $0xa8] sm:$0xff] %v192
                %v194 = vld [vmem:[%s148 + $0x160] sm:$0xff]
                %195 = vst [vmem:[%s149 + $0xb0] sm:$0xff] %v194
                %v196 = vld [vmem:[%s148 + $0x168] sm:$0xff]
                %197 = vst [vmem:[%s149 + $0xb8] sm:$0xff] %v196
                %v198 = vld [vmem:[%s148 + $0x180] sm:$0xff]
                %199 = vst [vmem:[%s149 + $0xc0] sm:$0xff] %v198
                %v200 = vld [vmem:[%s148 + $0x188] sm:$0xff]
                %201 = vst [vmem:[%s149 + $0xc8] sm:$0xff] %v200
                %v202 = vld [vmem:[%s148 + $0x1a0] sm:$0xff]
                %203 = vst [vmem:[%s149 + $0xd0] sm:$0xff] %v202
                %v204 = vld [vmem:[%s148 + $0x1a8] sm:$0xff]
                %205 = vst [vmem:[%s149 + $0xd8] sm:$0xff] %v204
                %v206 = vld [vmem:[%s148 + $0x1c0] sm:$0xff]
                %207 = vst [vmem:[%s149 + $0xe0] sm:$0xff] %v206
                %v208 = vld [vmem:[%s148 + $0x1c8] sm:$0xff]
                %209 = vst [vmem:[%s149 + $0xe8] sm:$0xff] %v208
                %v210 = vld [vmem:[%s148 + $0x1e0] sm:$0xff]
                %211 = vst [vmem:[%s149 + $0xf0] sm:$0xff] %v210
                %v212 = vld [vmem:[%s148 + $0x1e8] sm:$0xff]
                %213 = vst [vmem:[%s149 + $0xf8] sm:$0xff] %v212
                %v214 = vld [vmem:[%s148 + $0x200] sm:$0xff]
                %215 = vst [vmem:[%s149 + $0x100] sm:$0xff] %v214
                %v216 = vld [vmem:[%s148 + $0x208] sm:$0xff]
                %217 = vst [vmem:[%s149 + $0x108] sm:$0xff] %v216
                %v218 = vld [vmem:[%s148 + $0x220] sm:$0xff]
                %219 = vst [vmem:[%s149 + $0x110] sm:$0xff] %v218
                %v220 = vld [vmem:[%s148 + $0x228] sm:$0xff]
                %221 = vst [vmem:[%s149 + $0x118] sm:$0xff] %v220
                %v222 = vld [vmem:[%s148 + $0x240] sm:$0xff]
                %223 = vst [vmem:[%s149 + $0x120] sm:$0xff] %v222
                %v224 = vld [vmem:[%s148 + $0x248] sm:$0xff]
                %225 = vst [vmem:[%s149 + $0x128] sm:$0xff] %v224
                %v226 = vld [vmem:[%s148 + $0x260] sm:$0xff]
                %227 = vst [vmem:[%s149 + $0x130] sm:$0xff] %v226
                %v228 = vld [vmem:[%s148 + $0x268] sm:$0xff]
                %229 = vst [vmem:[%s149 + $0x138] sm:$0xff] %v228
                %v230 = vld [vmem:[%s148 + $0x280] sm:$0xff]
                %231 = vst [vmem:[%s149 + $0x140] sm:$0xff] %v230
                %v232 = vld [vmem:[%s148 + $0x288] sm:$0xff]
                %233 = vst [vmem:[%s149 + $0x148] sm:$0xff] %v232
                %v234 = vld [vmem:[%s148 + $0x2a0] sm:$0xff]
                %235 = vst [vmem:[%s149 + $0x150] sm:$0xff] %v234
                %v236 = vld [vmem:[%s148 + $0x2a8] sm:$0xff]
                %237 = vst [vmem:[%s149 + $0x158] sm:$0xff] %v236
                %v238 = vld [vmem:[%s148 + $0x2c0] sm:$0xff]
                %239 = vst [vmem:[%s149 + $0x160] sm:$0xff] %v238
                %v240 = vld [vmem:[%s148 + $0x2c8] sm:$0xff]
                %241 = vst [vmem:[%s149 + $0x168] sm:$0xff] %v240
                %v242 = vld [vmem:[%s148 + $0x2e0] sm:$0xff]
                %243 = vst [vmem:[%s149 + $0x170] sm:$0xff] %v242
                %v244 = vld [vmem:[%s148 + $0x2e8] sm:$0xff]
                %245 = vst [vmem:[%s149 + $0x178] sm:$0xff] %v244
                %v246 = vld [vmem:[%s148 + $0x300] sm:$0xff]
                %247 = vst [vmem:[%s149 + $0x180] sm:$0xff] %v246
                %v248 = vld [vmem:[%s148 + $0x308] sm:$0xff]
                %249 = vst [vmem:[%s149 + $0x188] sm:$0xff] %v248
                %v250 = vld [vmem:[%s148 + $0x320] sm:$0xff]
                %251 = vst [vmem:[%s149 + $0x190] sm:$0xff] %v250
                %v252 = vld [vmem:[%s148 + $0x328] sm:$0xff]
                %253 = vst [vmem:[%s149 + $0x198] sm:$0xff] %v252
                %v254 = vld [vmem:[%s148 + $0x340] sm:$0xff]
                %255 = vst [vmem:[%s149 + $0x1a0] sm:$0xff] %v254
                %v256 = vld [vmem:[%s148 + $0x348] sm:$0xff]
                %257 = vst [vmem:[%s149 + $0x1a8] sm:$0xff] %v256
                %v258 = vld [vmem:[%s148 + $0x360] sm:$0xff]
                %259 = vst [vmem:[%s149 + $0x1b0] sm:$0xff] %v258
                %v260 = vld [vmem:[%s148 + $0x368] sm:$0xff]
                %261 = vst [vmem:[%s149 + $0x1b8] sm:$0xff] %v260
                %v262 = vld [vmem:[%s148 + $0x380] sm:$0xff]
                %263 = vst [vmem:[%s149 + $0x1c0] sm:$0xff] %v262
                %v264 = vld [vmem:[%s148 + $0x388] sm:$0xff]
                %265 = vst [vmem:[%s149 + $0x1c8] sm:$0xff] %v264
                %v266 = vld [vmem:[%s148 + $0x3a0] sm:$0xff]
                %267 = vst [vmem:[%s149 + $0x1d0] sm:$0xff] %v266
                %v268 = vld [vmem:[%s148 + $0x3a8] sm:$0xff]
                %269 = vst [vmem:[%s149 + $0x1d8] sm:$0xff] %v268
                %v270 = vld [vmem:[%s148 + $0x3c0] sm:$0xff]
                %271 = vst [vmem:[%s149 + $0x1e0] sm:$0xff] %v270
                %v272 = vld [vmem:[%s148 + $0x3c8] sm:$0xff]
                %273 = vst [vmem:[%s149 + $0x1e8] sm:$0xff] %v272
                %v274 = vld [vmem:[%s148 + $0x3e0] sm:$0xff]
                %275 = vst [vmem:[%s149 + $0x1f0] sm:$0xff] %v274
                %v276 = vld [vmem:[%s148 + $0x3e8] sm:$0xff]
                %277 = vst [vmem:[%s149 + $0x1f8] sm:$0xff] %v276
                %v278 = vld [vmem:[%s148 + $0x400] sm:$0xff]
                %279 = vst [vmem:[%s149 + $0x200] sm:$0xff] %v278
                %v280 = vld [vmem:[%s148 + $0x408] sm:$0xff]
                %281 = vst [vmem:[%s149 + $0x208] sm:$0xff] %v280
                %v282 = vld [vmem:[%s148 + $0x420] sm:$0xff]
                %283 = vst [vmem:[%s149 + $0x210] sm:$0xff] %v282
                %v284 = vld [vmem:[%s148 + $0x428] sm:$0xff]
                %285 = vst [vmem:[%s149 + $0x218] sm:$0xff] %v284
                %v286 = vld [vmem:[%s148 + $0x440] sm:$0xff]
                %287 = vst [vmem:[%s149 + $0x220] sm:$0xff] %v286
                %v288 = vld [vmem:[%s148 + $0x448] sm:$0xff]
                %289 = vst [vmem:[%s149 + $0x228] sm:$0xff] %v288
                %v290 = vld [vmem:[%s148 + $0x460] sm:$0xff]
                %291 = vst [vmem:[%s149 + $0x230] sm:$0xff] %v290
                %v292 = vld [vmem:[%s148 + $0x468] sm:$0xff]
                %293 = vst [vmem:[%s149 + $0x238] sm:$0xff] %v292
              $region41: #{ct_conv3x3_forward.1} parent=35 // loop_footer
                %s147 = sadd.s32 1, %s143
              $region42: #{ct_conv3x3_forward.1} parent=35 // loop_footer_branch
                %142 = sbr.rel target = $region38
              $region43: #{ct_conv3x3_forward.1} parent=35 // loop_exit
                _
            $region36: #{ct_conv3x3_forward.1} parent=31 // pred_fallthru
              _
            // Predicated region
            $region44: #{ct_conv3x3_forward.1} parent=31 // pred_check
              _
            $region45: #{ct_conv3x3_forward.1} parent=31 // pred_check_branch
              %295 = sbr.rel target = $region47
            $region46: #{ct_conv3x3_forward.1} parent=31 // pred_region
              _
            $region47: #{ct_conv3x3_forward.1} parent=31 // pred_fallthru
              _
          $region32: #{ct_conv3x3_forward.1} parent=27 // pred_fallthru
            _
          %296 = vnop
        $region28: #{ct_conv3x3_forward.1} parent=23 // pred_fallthru
          _
      $region24: #{ct_conv3x3_forward.1} parent=5 // pred_fallthru
        _
      %p297 = scmp.le.s32.totalorder 1, %s9
      %p298 = scmp.lt.s32.totalorder %s9, 3
      %p299 = pnand %p297, %p298
      %p300 = pneg %p299
      // Predicated region
      $region48: #{ct_conv3x3_forward.1} parent=5 // pred_check
        _
      $region49: #{ct_conv3x3_forward.1} parent=5 // pred_check_branch
        %302 = sbr.rel (%p299) target = $region51
      $region50: #{ct_conv3x3_forward.1} parent=5 // pred_region
        %s303 = ssub.s32 %s9, 1
        %s304 = sand.u32 %s22, 1
        %s305 = sand.u32 %s22, 1
        %s306 = smul.addr %s305, 576
        %s307 = scalar_lea.vmem [#allocation2], %s306
        // Predicated region
        $region52: #{ct_conv3x3_forward.1} parent=50 // pred_check
          %p308 = pneg %p35
        $region53: #{ct_conv3x3_forward.1} parent=50 // pred_check_branch
          %310 = sbr.rel (%p308) target = $region55
        $region54: #{ct_conv3x3_forward.1} parent=50 // pred_region
          _
        $region55: #{ct_conv3x3_forward.1} parent=50 // pred_fallthru
          _
        %s311 = sand.u32 %s22, 1
        %s312 = sand.u32 %s22, 1
        %s313 = smul.addr %s312, 576
        %s314 = scalar_lea.vmem [#allocation2], %s313
        %p315 = pneg %p35
        %p316 = pneg %p32
        %p317 = pneg %p56
        %p318 = pneg %p53
        %p319 = pneg %p77
        %p320 = pneg %p74
        %p321 = pneg %p103
        %p322 = pneg %p100
        %s323 = sand.u32 %s90, 1
        %s324 = sand.u32 %s90, 1
        %s325 = smul.addr %s324, 128
        %s326 = scalar_lea.vmem [#allocation3], %s325
        %s327 = smul.u32 2, %s14
        %s328 = smul.u32 2, %s14
        %v329 = vld [vmem:[%s1] sm:$0xff]
        %v330 = vld [vmem:[%s1 + $0x8] sm:$0xff]
        %v331 = vld [vmem:[%s1 + $0x10] sm:$0xff]
        %v332 = vld [vmem:[%s1 + $0x18] sm:$0xff]
        %v333 = vld [vmem:[%s1 + $0x20] sm:$0xff]
        %v334 = vld [vmem:[%s1 + $0x28] sm:$0xff]
        %v335 = vld [vmem:[%s1 + $0x30] sm:$0xff]
        %v336 = vld [vmem:[%s1 + $0x38] sm:$0xff]
        %v337 = vld [vmem:[%s1 + $0x40] sm:$0xff]
        %v338 = vld [vmem:[%s1 + $0x48] sm:$0xff]
        %v339 = vld [vmem:[%s1 + $0x50] sm:$0xff]
        %v340 = vld [vmem:[%s1 + $0x58] sm:$0xff]
        %v341 = vld [vmem:[%s1 + $0x60] sm:$0xff]
        %v342 = vld [vmem:[%s1 + $0x68] sm:$0xff]
        %v343 = vld [vmem:[%s1 + $0x70] sm:$0xff]
        %v344 = vld [vmem:[%s1 + $0x78] sm:$0xff]
        %v345 = vld [vmem:[%s1 + $0x80] sm:$0xff]
        %v346 = vld [vmem:[%s1 + $0x88] sm:$0xff]
        %v347 = vld [vmem:[%s1 + $0x90] sm:$0xff]
        %v348 = vld [vmem:[%s1 + $0x98] sm:$0xff]
        %v349 = vld [vmem:[%s1 + $0xa0] sm:$0xff]
        %v350 = vld [vmem:[%s1 + $0xa8] sm:$0xff]
        %v351 = vld [vmem:[%s1 + $0xb0] sm:$0xff]
        %v352 = vld [vmem:[%s1 + $0xb8] sm:$0xff]
        %v353 = vld [vmem:[%s307] sm:$0xff]
        %v354 = vld [vmem:[%s307 + $0x8] sm:$0xff]
        %v355 = vld [vmem:[%s307 + $0x10] sm:$0xff]
        %v356 = vld [vmem:[%s307 + $0x18] sm:$0xff]
        %v357 = vld [vmem:[%s307 + $0x20] sm:$0xff]
        %v358 = vld [vmem:[%s307 + $0x28] sm:$0xff]
        %v359 = vld [vmem:[%s307 + $0x30] sm:$0xff]
        %v360 = vld [vmem:[%s307 + $0x38] sm:$0xff]
        %v361 = vld [vmem:[%s307 + $0x40] sm:$0xff]
        %v362 = vld [vmem:[%s307 + $0x48] sm:$0xff]
        %v363 = vld [vmem:[%s307 + $0x50] sm:$0xff]
        %v364 = vld [vmem:[%s307 + $0x58] sm:$0xff]
        %v365 = vld [vmem:[%s307 + $0x60] sm:$0xff]
        %v366 = vld [vmem:[%s307 + $0x68] sm:$0xff]
        %v367 = vld [vmem:[%s307 + $0x70] sm:$0xff]
        %v368 = vld [vmem:[%s307 + $0x78] sm:$0xff]
        %v369 = vld [vmem:[%s307 + $0x80] sm:$0xff]
        %v370 = vld [vmem:[%s307 + $0x88] sm:$0xff]
        %v371 = vld [vmem:[%s307 + $0x90] sm:$0xff]
        %v372 = vld [vmem:[%s307 + $0x98] sm:$0xff]
        %v373 = vld [vmem:[%s307 + $0xa0] sm:$0xff]
        %v374 = vld [vmem:[%s307 + $0xa8] sm:$0xff]
        %v375 = vld [vmem:[%s307 + $0xb0] sm:$0xff]
        %v376 = vld [vmem:[%s307 + $0xb8] sm:$0xff]
        %v377 = vld [vmem:[%s307 + $0xc0] sm:$0xff]
        %v378 = vld [vmem:[%s307 + $0xc8] sm:$0xff]
        %v379 = vld [vmem:[%s307 + $0xd0] sm:$0xff]
        %v380 = vld [vmem:[%s307 + $0xd8] sm:$0xff]
        %v381 = vld [vmem:[%s307 + $0xe0] sm:$0xff]
        %v382 = vld [vmem:[%s307 + $0xe8] sm:$0xff]
        %v383 = vld [vmem:[%s307 + $0xf0] sm:$0xff]
        %v384 = vld [vmem:[%s307 + $0xf8] sm:$0xff]
        %v385 = vld [vmem:[%s307 + $0x100] sm:$0xff]
        %v386 = vld [vmem:[%s307 + $0x108] sm:$0xff]
        %v387 = vld [vmem:[%s307 + $0x110] sm:$0xff]
        %v388 = vld [vmem:[%s307 + $0x118] sm:$0xff]
        %v389 = vld [vmem:[%s307 + $0x120] sm:$0xff]
        %v390 = vld [vmem:[%s307 + $0x128] sm:$0xff]
        %v391 = vld [vmem:[%s307 + $0x130] sm:$0xff]
        %v392 = vld [vmem:[%s307 + $0x138] sm:$0xff]
        %v393 = vld [vmem:[%s307 + $0x140] sm:$0xff]
        %v394 = vld [vmem:[%s307 + $0x148] sm:$0xff]
        %v395 = vld [vmem:[%s307 + $0x150] sm:$0xff]
        %v396 = vld [vmem:[%s307 + $0x158] sm:$0xff]
        %v397 = vld [vmem:[%s307 + $0x160] sm:$0xff]
        %v398 = vld [vmem:[%s307 + $0x168] sm:$0xff]
        %v399 = vld [vmem:[%s307 + $0x170] sm:$0xff]
        %v400 = vld [vmem:[%s307 + $0x178] sm:$0xff]
        %v401 = vld [vmem:[%s307 + $0x180] sm:$0xff]
        %v402 = vld [vmem:[%s307 + $0x188] sm:$0xff]
        %v403 = vld [vmem:[%s307 + $0x190] sm:$0xff]
        %v404 = vld [vmem:[%s307 + $0x198] sm:$0xff]
        %v405 = vld [vmem:[%s307 + $0x1a0] sm:$0xff]
        %v406 = vld [vmem:[%s307 + $0x1a8] sm:$0xff]
        %v407 = vld [vmem:[%s307 + $0x1b0] sm:$0xff]
        %v408 = vld [vmem:[%s307 + $0x1b8] sm:$0xff]
        %v409 = vld [vmem:[%s307 + $0x1c0] sm:$0xff]
        %v410 = vld [vmem:[%s307 + $0x1c8] sm:$0xff]
        %v411 = vld [vmem:[%s307 + $0x1d0] sm:$0xff]
        %v412 = vld [vmem:[%s307 + $0x1d8] sm:$0xff]
        %v413 = vld [vmem:[%s307 + $0x1e0] sm:$0xff]
        %v414 = vld [vmem:[%s307 + $0x1e8] sm:$0xff]
        %v415 = vld [vmem:[%s307 + $0x1f0] sm:$0xff]
        %v416 = vld [vmem:[%s307 + $0x1f8] sm:$0xff]
        %v417 = vld [vmem:[%s307 + $0x200] sm:$0xff]
        %v418 = vld [vmem:[%s307 + $0x208] sm:$0xff]
        %v419 = vld [vmem:[%s307 + $0x210] sm:$0xff]
        %v420 = vld [vmem:[%s307 + $0x218] sm:$0xff]
        %v421 = vld [vmem:[%s307 + $0x220] sm:$0xff]
        %v422 = vld [vmem:[%s307 + $0x228] sm:$0xff]
        %v423 = vld [vmem:[%s307 + $0x230] sm:$0xff]
        %v424 = vld [vmem:[%s307 + $0x238] sm:$0xff]
        %v425 = vld [vmem:[%s2] sm:$0xff]
        %v426 = vld [vmem:[%s2 + $0x8] sm:$0xff]
        %v427 = vld [vmem:[%s2 + $0x10] sm:$0xff]
        %v428 = vld [vmem:[%s2 + $0x18] sm:$0xff]
        %v429 = vld [vmem:[%s2 + $0x20] sm:$0xff]
        %v430 = vld [vmem:[%s2 + $0x28] sm:$0xff]
        %v431 = vld [vmem:[%s2 + $0x30] sm:$0xff]
        %v432 = vld [vmem:[%s2 + $0x38] sm:$0xff]
        %434 = vset.pattern.permute.xlu0 0
        %435 = vperm.xlu0 %434, %v425
        %v436 = vpop.permute.xlu0 %435
        %439 = vset.pattern.permute.xlu0 0
        %440 = vperm.xlu0 %439, %v426
        %v441 = vpop.permute.xlu0 %440
        %444 = vset.pattern.permute.xlu0 0
        %445 = vperm.xlu0 %444, %v427
        %v446 = vpop.permute.xlu0 %445
        %449 = vset.pattern.permute.xlu0 0
        %450 = vperm.xlu0 %449, %v428
        %v451 = vpop.permute.xlu0 %450
        %454 = vset.pattern.permute.xlu0 0
        %455 = vperm.xlu0 %454, %v429
        %v456 = vpop.permute.xlu0 %455
        %459 = vset.pattern.permute.xlu0 0
        %460 = vperm.xlu0 %459, %v430
        %v461 = vpop.permute.xlu0 %460
        %464 = vset.pattern.permute.xlu0 0
        %465 = vperm.xlu0 %464, %v431
        %v466 = vpop.permute.xlu0 %465
        %469 = vset.pattern.permute.xlu0 0
        %470 = vperm.xlu0 %469, %v432
        %v471 = vpop.permute.xlu0 %470
        %vm473 = vcmask 261120
        %v475 = vsel %vm473, %v331, 0
        %v478 = vsel %vm473, %v334, 0
        %v481 = vsel %vm473, %v337, 0
        %v484 = vsel %vm473, %v340, 0
        %v487 = vsel %vm473, %v343, 0
        %v490 = vsel %vm473, %v346, 0
        %v493 = vsel %vm473, %v349, 0
        %v496 = vsel %vm473, %v352, 0
        %498 = vmatprep.subr.mxu0 %v354
        %499 = vmatpush1.msra.mxu0 %v353
        %500 = vmatprep.subr.mxu0 %v356
        %501 = vmatpush1.msra.mxu0 %v355
        %502 = vmatprep.subr.mxu0 %v358
        %503 = vmatpush1.msra.mxu0 %v357
        %504 = vmatprep.subr.mxu0 %v360
        %505 = vmatpush1.msra.mxu0 %v359
        %506 = vmatprep.subr.mxu0 %v362
        %507 = vmatpush1.msra.mxu0 %v361
        %508 = vmatprep.subr.mxu0 %v364
        %509 = vmatpush1.msra.mxu0 %v363
        %510 = vmatprep.subr.mxu0 %v366
        %511 = vmatpush1.msra.mxu0 %v365
        %512 = vmatprep.subr.mxu0 %v368
        %513 = vmatpush1.msra.mxu0 %v367
        %514 = vmatprep.subr.mxu0 %v370
        %515 = vmatpush1.msra.mxu0 %v369
        %516 = vmatprep.subr.mxu0 %v372
        %517 = vmatpush1.msra.mxu0 %v371
        %518 = vmatprep.subr.mxu0 %v374
        %519 = vmatpush1.msra.mxu0 %v373
        %520 = vmatprep.subr.mxu0 %v376
        %521 = vmatpush1.msra.mxu0 %v375
        %522 = vmatprep.subr.mxu0 %v378
        %523 = vmatpush1.msra.mxu0 %v377
        %524 = vmatprep.subr.mxu0 %v380
        %525 = vmatpush1.msra.mxu0 %v379
        %526 = vmatprep.subr.mxu0 %v382
        %527 = vmatpush1.msra.mxu0 %v381
        %528 = vmatprep.subr.mxu0 %v384
        %529 = vmatpush1.msra.mxu0 %v383
        %530 = vmatprep.subr.mxu0 %v386
        %531 = vmatpush1.msra.mxu0 %v385
        %532 = vmatprep.subr.mxu0 %v388
        %533 = vmatpush1.msra.mxu0 %v387
        %534 = vmatprep.subr.mxu0 %v390
        %535 = vmatpush1.msra.mxu0 %v389
        %536 = vmatprep.subr.mxu0 %v392
        %537 = vmatpush1.msra.mxu0 %v391
        %538 = vmatprep.subr.mxu0 %v394
        %539 = vmatpush1.msra.mxu0 %v393
        %540 = vmatprep.subr.mxu0 %v396
        %541 = vmatpush1.msra.mxu0 %v395
        %542 = vmatprep.subr.mxu0 %v398
        %543 = vmatpush1.msra.mxu0 %v397
        %544 = vmatprep.subr.mxu0 %v400
        %545 = vmatpush1.msra.mxu0 %v399
        %546 = vmatprep.subr.mxu0 %v402
        %547 = vmatpush1.msra.mxu0 %v401
        %548 = vmatprep.subr.mxu0 %v404
        %549 = vmatpush1.msra.mxu0 %v403
        %550 = vmatprep.subr.mxu0 %v406
        %551 = vmatpush1.msra.mxu0 %v405
        %552 = vmatprep.subr.mxu0 %v408
        %553 = vmatpush1.msra.mxu0 %v407
        %554 = vmatprep.subr.mxu0 %v410
        %555 = vmatpush1.msra.mxu0 %v409
        %556 = vmatprep.subr.mxu0 %v412
        %557 = vmatpush1.msra.mxu0 %v411
        %558 = vmatprep.subr.mxu0 %v414
        %559 = vmatpush1.msra.mxu0 %v413
        %560 = vmatprep.subr.mxu0 %v416
        %561 = vmatpush1.msra.mxu0 %v415
        %562 = vmatprep.mubr.f32.mxu0 %v330
        %563 = vmatmul.mubr.f32.gmra.mrb[0].mxu0 %v329
        %v564 = vpop.f32.mrb[0].mxu0
        %v565 = vadd.f32 %v436, %v564
        %v566 = vpop.f32.mrb[0].mxu0
        %v567 = vadd.f32 %v436, %v566
        %568 = vmatprep.mubr.f32.mxu0 %v333
        %569 = vmatmul.mubr.f32.gmra.mrb[0].mxu0 %v332
        %v570 = vpop.f32.mrb[0].mxu0
        %v571 = vadd.f32 %v441, %v570
        %v572 = vpop.f32.mrb[0].mxu0
        %v573 = vadd.f32 %v441, %v572
        %574 = vmatprep.mubr.f32.mxu0 %v336
        %575 = vmatmul.mubr.f32.gmra.mrb[0].mxu0 %v335
        %v576 = vpop.f32.mrb[0].mxu0
        %v577 = vadd.f32 %v446, %v576
        %v578 = vpop.f32.mrb[0].mxu0
        %v579 = vadd.f32 %v446, %v578
        %580 = vmatprep.mubr.f32.mxu0 %v339
        %581 = vmatmul.mubr.f32.gmra.mrb[0].mxu0 %v338
        %v582 = vpop.f32.mrb[0].mxu0
        %v583 = vadd.f32 %v451, %v582
        %v584 = vpop.f32.mrb[0].mxu0
        %v585 = vadd.f32 %v451, %v584
        %586 = vmatprep.mubr.f32.mxu0 %v342
        %587 = vmatmul.mubr.f32.gmra.mrb[0].mxu0 %v341
        %v588 = vpop.f32.mrb[0].mxu0
        %v589 = vadd.f32 %v456, %v588
        %v590 = vpop.f32.mrb[0].mxu0
        %v591 = vadd.f32 %v456, %v590
        %592 = vmatprep.mubr.f32.mxu0 %v345
        %593 = vmatmul.mubr.f32.gmra.mrb[0].mxu0 %v344
        %v594 = vpop.f32.mrb[0].mxu0
        %v595 = vadd.f32 %v461, %v594
        %v596 = vpop.f32.mrb[0].mxu0
        %v597 = vadd.f32 %v461, %v596
        %598 = vmatprep.mubr.f32.mxu0 %v348
        %599 = vmatmul.mubr.f32.gmra.mrb[0].mxu0 %v347
        %v600 = vpop.f32.mrb[0].mxu0
        %v601 = vadd.f32 %v466, %v600
        %v602 = vpop.f32.mrb[0].mxu0
        %v603 = vadd.f32 %v466, %v602
        %604 = vmatprep.mubr.f32.mxu0 %v351
        %605 = vmatmul.mubr.f32.gmra.mrb[0].mxu0 %v350
        %v606 = vpop.f32.mrb[0].mxu0
        %v607 = vadd.f32 %v471, %v606
        %v608 = vpop.f32.mrb[0].mxu0
        %v609 = vadd.f32 %v471, %v608
        %610 = vdwg.mxu0
        %611 = vmatprep.subr.mxu0 %v418
        %612 = vmatpush1.msra.mxu0 %v417
        %613 = vmatprep.subr.mxu0 %v420
        %614 = vmatpush1.msra.mxu0 %v419
        %615 = vmatprep.subr.mxu0 %v422
        %616 = vmatpush1.msra.mxu0 %v421
        %617 = vmatprep.subr.mxu0 %v424
        %618 = vmatpush1.msra.mxu0 %v423
        %619 = vmatprep.subr.mxu0 0.0
        %620 = vmatpush1.msra.mxu0 0.0
        %621 = vmatprep.subr.mxu0 0.0
        %622 = vmatpush1.msra.mxu0 0.0
        %623 = vmatprep.subr.mxu0 0.0
        %624 = vmatpush1.msra.mxu0 0.0
        %625 = vmatprep.subr.mxu0 0.0
        %626 = vmatpush1.msra.mxu0 0.0
        %627 = vmatprep.subr.mxu0 0.0
        %628 = vmatpush1.msra.mxu0 0.0
        %629 = vmatprep.subr.mxu0 0.0
        %630 = vmatpush1.msra.mxu0 0.0
        %631 = vmatprep.subr.mxu0 0.0
        %632 = vmatpush1.msra.mxu0 0.0
        %633 = vmatprep.subr.mxu0 0.0
        %634 = vmatpush1.msra.mxu0 0.0
        %635 = vmatprep.subr.mxu0 0.0
        %636 = vmatpush1.msra.mxu0 0.0
        %637 = vmatprep.subr.mxu0 0.0
        %638 = vmatpush1.msra.mxu0 0.0
        %639 = vmatprep.subr.mxu0 0.0
        %640 = vmatpush1.msra.mxu0 0.0
        %641 = vmatprep.subr.mxu0 0.0
        %642 = vmatpush1.msra.mxu0 0.0
        %643 = vmatprep.subr.mxu0 0.0
        %644 = vmatpush1.msra.mxu0 0.0
        %645 = vmatprep.subr.mxu0 0.0
        %646 = vmatpush1.msra.mxu0 0.0
        %647 = vmatprep.subr.mxu0 0.0
        %648 = vmatpush1.msra.mxu0 0.0
        %649 = vmatprep.subr.mxu0 0.0
        %650 = vmatpush1.msra.mxu0 0.0
        %651 = vmatprep.subr.mxu0 0.0
        %652 = vmatpush1.msra.mxu0 0.0
        %653 = vmatprep.subr.mxu0 0.0
        %654 = vmatpush1.msra.mxu0 0.0
        %655 = vmatprep.subr.mxu0 0.0
        %656 = vmatpush1.msra.mxu0 0.0
        %657 = vmatprep.subr.mxu0 0.0
        %658 = vmatpush1.msra.mxu0 0.0
        %659 = vmatprep.subr.mxu0 0.0
        %660 = vmatpush1.msra.mxu0 0.0
        %661 = vmatprep.subr.mxu0 0.0
        %662 = vmatpush1.msra.mxu0 0.0
        %663 = vmatprep.subr.mxu0 0.0
        %664 = vmatpush1.msra.mxu0 0.0
        %665 = vmatprep.subr.mxu0 0.0
        %666 = vmatpush1.msra.mxu0 0.0
        %667 = vmatprep.subr.mxu0 0.0
        %668 = vmatpush1.msra.mxu0 0.0
        %669 = vmatprep.subr.mxu0 0.0
        %670 = vmatpush1.msra.mxu0 0.0
        %671 = vmatprep.subr.mxu0 0.0
        %672 = vmatpush1.msra.mxu0 0.0
        %673 = vmatprep.subr.mxu0 0.0
        %674 = vmatpush1.msra.mxu0 0.0
        %675 = vmatprep.mubr.f32.mxu0 0.0
        %676 = vmatmul.mubr.f32.gmra.mrb[0].mxu0 %v475
        %v677 = vpop.f32.mrb[0].mxu0
        %v678 = vadd.f32 %v565, %v677
        %v679 = vpop.f32.mrb[0].mxu0
        %v680 = vadd.f32 %v567, %v679
        %681 = vmatprep.mubr.f32.mxu0 0.0
        %682 = vmatmul.mubr.f32.gmra.mrb[0].mxu0 %v478
        %v683 = vpop.f32.mrb[0].mxu0
        %v684 = vadd.f32 %v571, %v683
        %v685 = vpop.f32.mrb[0].mxu0
        %v686 = vadd.f32 %v573, %v685
        %687 = vmatprep.mubr.f32.mxu0 0.0
        %688 = vmatmul.mubr.f32.gmra.mrb[0].mxu0 %v481
        %v689 = vpop.f32.mrb[0].mxu0
        %v690 = vadd.f32 %v577, %v689
        %v691 = vpop.f32.mrb[0].mxu0
        %v692 = vadd.f32 %v579, %v691
        %693 = vmatprep.mubr.f32.mxu0 0.0
        %694 = vmatmul.mubr.f32.gmra.mrb[0].mxu0 %v484
        %v695 = vpop.f32.mrb[0].mxu0
        %v696 = vadd.f32 %v583, %v695
        %v697 = vpop.f32.mrb[0].mxu0
        %v698 = vadd.f32 %v585, %v697
        %699 = vmatprep.mubr.f32.mxu0 0.0
        %700 = vmatmul.mubr.f32.gmra.mrb[0].mxu0 %v487
        %v701 = vpop.f32.mrb[0].mxu0
        %v702 = vadd.f32 %v589, %v701
        %v703 = vpop.f32.mrb[0].mxu0
        %v704 = vadd.f32 %v591, %v703
        %705 = vmatprep.mubr.f32.mxu0 0.0
        %706 = vmatmul.mubr.f32.gmra.mrb[0].mxu0 %v490
        %v707 = vpop.f32.mrb[0].mxu0
        %v708 = vadd.f32 %v595, %v707
        %v709 = vpop.f32.mrb[0].mxu0
        %v710 = vadd.f32 %v597, %v709
        %711 = vmatprep.mubr.f32.mxu0 0.0
        %712 = vmatmul.mubr.f32.gmra.mrb[0].mxu0 %v493
        %v713 = vpop.f32.mrb[0].mxu0
        %v714 = vadd.f32 %v601, %v713
        %v715 = vpop.f32.mrb[0].mxu0
        %v716 = vadd.f32 %v603, %v715
        %717 = vmatprep.mubr.f32.mxu0 0.0
        %718 = vmatmul.mubr.f32.gmra.mrb[0].mxu0 %v496
        %v719 = vpop.f32.mrb[0].mxu0
        %v720 = vadd.f32 %v607, %v719
        %v721 = vpop.f32.mrb[0].mxu0
        %v722 = vadd.f32 %v609, %v721
        %723 = vdwg.mxu0
        %v724 = vmax.f32 %v678, 0.0
        %v725 = vmax.f32 %v680, 0.0
        %v726 = vmax.f32 %v684, 0.0
        %v727 = vmax.f32 %v686, 0.0
        %v728 = vmax.f32 %v690, 0.0
        %v729 = vmax.f32 %v692, 0.0
        %v730 = vmax.f32 %v696, 0.0
        %v731 = vmax.f32 %v698, 0.0
        %v732 = vmax.f32 %v702, 0.0
        %v733 = vmax.f32 %v704, 0.0
        %v734 = vmax.f32 %v708, 0.0
        %v735 = vmax.f32 %v710, 0.0
        %v736 = vmax.f32 %v714, 0.0
        %v737 = vmax.f32 %v716, 0.0
        %v738 = vmax.f32 %v720, 0.0
        %v739 = vmax.f32 %v722, 0.0
        %740 = vst [vmem:[%s326] sm:$0xff] %v724
        %741 = vst [vmem:[%s326 + $0x8] sm:$0xff] %v725
        %742 = vst [vmem:[%s326 + $0x10] sm:$0xff] %v726
        %743 = vst [vmem:[%s326 + $0x18] sm:$0xff] %v727
        %744 = vst [vmem:[%s326 + $0x20] sm:$0xff] %v728
        %745 = vst [vmem:[%s326 + $0x28] sm:$0xff] %v729
        %746 = vst [vmem:[%s326 + $0x30] sm:$0xff] %v730
        %747 = vst [vmem:[%s326 + $0x38] sm:$0xff] %v731
        %748 = vst [vmem:[%s326 + $0x40] sm:$0xff] %v732
        %749 = vst [vmem:[%s326 + $0x48] sm:$0xff] %v733
        %750 = vst [vmem:[%s326 + $0x50] sm:$0xff] %v734
        %751 = vst [vmem:[%s326 + $0x58] sm:$0xff] %v735
        %752 = vst [vmem:[%s326 + $0x60] sm:$0xff] %v736
        %753 = vst [vmem:[%s326 + $0x68] sm:$0xff] %v737
        %754 = vst [vmem:[%s326 + $0x70] sm:$0xff] %v738
        %755 = vst [vmem:[%s326 + $0x78] sm:$0xff] %v739
        %s756 = sand.u32 %s90, 1
        %s757 = sand.u32 %s90, 1
        %s758 = smul.addr %s757, 128
        %s759 = scalar_lea.vmem [#allocation3], %s758
        // Predicated region
        $region56: #{ct_conv3x3_forward.1} parent=50 // pred_check
          %p760 = pneg %p100
        $region57: #{ct_conv3x3_forward.1} parent=50 // pred_check_branch
          %762 = sbr.rel (%p760) target = $region59
        $region58: #{ct_conv3x3_forward.1} parent=50 // pred_region
          %s763 = smul.u32 2, %s14
          %s764 = smul.addr %s763, 8
          %s765 = scalar_lea.vmem %s3, %s764
          // Predicated region
          $region60: #{ct_conv3x3_forward.1} parent=58 // pred_check
            _
          $region61: #{ct_conv3x3_forward.1} parent=58 // pred_check_branch
            %767 = sbr.rel (0) target = $region63
          $region62: #{ct_conv3x3_forward.1} parent=58 // pred_region
            // Predicated region
            $region64: #{ct_conv3x3_forward.1} parent=62 // pred_check
              _
            $region65: #{ct_conv3x3_forward.1} parent=62 // pred_check_branch
              %769 = sbr.rel (0) target = $region67
            $region66: #{ct_conv3x3_forward.1} parent=62 // pred_region
              loop: start=0, step=1, limit=1
              $region68: #{ct_conv3x3_forward.1} parent=66 // loop_pre_header
                _
              $region69: #{ct_conv3x3_forward.1} parent=66 // loop_header
                %s771 = sphi 0, %s775
                %p772 = scmp.ge.s32.totalorder %s771, 1
                %s776 = sphi %s759, %s759
                %s777 = sphi %s765, %s765
              $region70: #{ct_conv3x3_forward.1} parent=66 // loop_header_branch
                %774 = sbr.rel (%p772) target = $region74
              $region71: #{ct_conv3x3_forward.1} parent=66 // loop_body
                %v778 = vld [vmem:[%s776] sm:$0xff]
                %779 = vst [vmem:[%s777] sm:$0xff] %v778
                %v780 = vld [vmem:[%s776 + $0x8] sm:$0xff]
                %781 = vst [vmem:[%s777 + $0x8] sm:$0xff] %v780
                %v782 = vld [vmem:[%s776 + $0x10] sm:$0xff]
                %783 = vst [vmem:[%s777 + $0x20] sm:$0xff] %v782
                %v784 = vld [vmem:[%s776 + $0x18] sm:$0xff]
                %785 = vst [vmem:[%s777 + $0x28] sm:$0xff] %v784
                %v786 = vld [vmem:[%s776 + $0x20] sm:$0xff]
                %787 = vst [vmem:[%s777 + $0x40] sm:$0xff] %v786
                %v788 = vld [vmem:[%s776 + $0x28] sm:$0xff]
                %789 = vst [vmem:[%s777 + $0x48] sm:$0xff] %v788
                %v790 = vld [vmem:[%s776 + $0x30] sm:$0xff]
                %791 = vst [vmem:[%s777 + $0x60] sm:$0xff] %v790
                %v792 = vld [vmem:[%s776 + $0x38] sm:$0xff]
                %793 = vst [vmem:[%s777 + $0x68] sm:$0xff] %v792
                %v794 = vld [vmem:[%s776 + $0x40] sm:$0xff]
                %795 = vst [vmem:[%s777 + $0x80] sm:$0xff] %v794
                %v796 = vld [vmem:[%s776 + $0x48] sm:$0xff]
                %797 = vst [vmem:[%s777 + $0x88] sm:$0xff] %v796
                %v798 = vld [vmem:[%s776 + $0x50] sm:$0xff]
                %799 = vst [vmem:[%s777 + $0xa0] sm:$0xff] %v798
                %v800 = vld [vmem:[%s776 + $0x58] sm:$0xff]
                %801 = vst [vmem:[%s777 + $0xa8] sm:$0xff] %v800
                %v802 = vld [vmem:[%s776 + $0x60] sm:$0xff]
                %803 = vst [vmem:[%s777 + $0xc0] sm:$0xff] %v802
                %v804 = vld [vmem:[%s776 + $0x68] sm:$0xff]
                %805 = vst [vmem:[%s777 + $0xc8] sm:$0xff] %v804
                %v806 = vld [vmem:[%s776 + $0x70] sm:$0xff]
                %807 = vst [vmem:[%s777 + $0xe0] sm:$0xff] %v806
                %v808 = vld [vmem:[%s776 + $0x78] sm:$0xff]
                %809 = vst [vmem:[%s777 + $0xe8] sm:$0xff] %v808
              $region72: #{ct_conv3x3_forward.1} parent=66 // loop_footer
                %s775 = sadd.s32 1, %s771
              $region73: #{ct_conv3x3_forward.1} parent=66 // loop_footer_branch
                %770 = sbr.rel target = $region69
              $region74: #{ct_conv3x3_forward.1} parent=66 // loop_exit
                _
            $region67: #{ct_conv3x3_forward.1} parent=62 // pred_fallthru
              _
            // Predicated region
            $region75: #{ct_conv3x3_forward.1} parent=62 // pred_check
              _
            $region76: #{ct_conv3x3_forward.1} parent=62 // pred_check_branch
              %811 = sbr.rel target = $region78
            $region77: #{ct_conv3x3_forward.1} parent=62 // pred_region
              _
            $region78: #{ct_conv3x3_forward.1} parent=62 // pred_fallthru
              _
          $region63: #{ct_conv3x3_forward.1} parent=58 // pred_fallthru
            _
          %812 = vnop
        $region59: #{ct_conv3x3_forward.1} parent=50 // pred_fallthru
          _
      $region51: #{ct_conv3x3_forward.1} parent=5 // pred_fallthru
        _
      %p813 = scmp.le.s32.totalorder 2, %s9
      // Predicated region
      $region79: #{ct_conv3x3_forward.1} parent=5 // pred_check
        %p814 = pneg %p813
      $region80: #{ct_conv3x3_forward.1} parent=5 // pred_check_branch
        %816 = sbr.rel (%p814) target = $region82
      $region81: #{ct_conv3x3_forward.1} parent=5 // pred_region
        %s817 = ssub.s32 %s9, 2
        // Predicated region
        $region83: #{ct_conv3x3_forward.1} parent=81 // pred_check
          %p818 = pneg %p106
        $region84: #{ct_conv3x3_forward.1} parent=81 // pred_check_branch
          %820 = sbr.rel (%p818) target = $region86
        $region85: #{ct_conv3x3_forward.1} parent=81 // pred_region
          %s821 = sand.u32 %s91, 1
          %s822 = sand.u32 %s91, 1
          %s823 = smul.addr %s822, 128
          %s824 = scalar_lea.vmem [#allocation3], %s823
        $region86: #{ct_conv3x3_forward.1} parent=81 // pred_fallthru
          _
      $region82: #{ct_conv3x3_forward.1} parent=5 // pred_fallthru
        _
    $region6: #{ct_conv3x3_forward.1} parent=1 // loop_footer
      %s13 = sadd.s32 1, %s9
    $region7: #{ct_conv3x3_forward.1} parent=1 // loop_footer_branch
      %8 = sbr.rel target = $region3
    $region8: #{ct_conv3x3_forward.1} parent=1 // loop_exit
      _

</llo_original>
